<compile_context>
chip_gen: v7x
topology: tpu7x:2x2x1
jax: 0.10.0
libtpu: 0.0.40
codegen_flags: <defaults>
</compile_context>

<pallas_src>
import functools

import jax
import jax.numpy as jnp
from jax.experimental import pallas as pl
from jax.experimental.pallas import tpu as pltpu


def _round_up(x, m):
    return ((x + m - 1) // m) * m


def _mish(x):
    """Exact PyTorch Mish: x * tanh(softplus(x)), softplus threshold = 20.

    All in f32.  exp/log/tanh go to the EUP slot, so they overlap with the
    MXU matmuls and cost ~nothing at these channel counts.
    """
    sp = jnp.log(1.0 + jnp.exp(jnp.minimum(x, 20.0)))
    sp = jnp.where(x > 20.0, x, sp)          # threshold branch: softplus(x)=x
    return x * jnp.tanh(sp)


def _resblock_kernel_proj(x_ref, wcat_ref, w2_ref, o_ref, *, c_out):
    # channels != out_channels: residual path has its own 1x1 conv + Mish.
    x = x_ref[0]                                              # (C, TILE_L)
    # Fused [W_res ; W1] matmul: (Cout+Cmid, C) @ (C, TILE_L), f32 accumulate.
    rh = _mish(jnp.dot(wcat_ref[...], x,
                       preferred_element_type=jnp.float32))   # (Cout+Cmid, TILE_L)
    res = rh[:c_out]                                          # (Cout, TILE_L)
    h = rh[c_out:]                                            # (Cmid, TILE_L)
    y = jnp.dot(w2_ref[...], h.astype(w2_ref.dtype),
                preferred_element_type=jnp.float32)           # (Cout, TILE_L)
    o_ref[0] = _mish(res + y).astype(o_ref.dtype)


def _resblock_kernel_ident(x_ref, w1_ref, w2_ref, o_ref):
    # channels == out_channels: identity residual (kept in f32).
    x = x_ref[0]                                              # (C, TILE_L)
    h = _mish(jnp.dot(w1_ref[...], x.astype(w1_ref.dtype),
                      preferred_element_type=jnp.float32))    # (Cmid, TILE_L)
    y = jnp.dot(w2_ref[...], h.astype(w2_ref.dtype),
                preferred_element_type=jnp.float32)           # (Cout, TILE_L)
    o_ref[0] = _mish(x.astype(jnp.float32) + y).astype(o_ref.dtype)


def _tile_l_from_budget(Lp, N, C, Cmid, Cout, w_elems, x_itemsize, w_itemsize,
                        data_budget_bytes):
    """Pick the L tile (multiple of 128) from a VMEM byte budget."""
    # Bytes per L-column per grid step:
    #   x block (2 pipeline buffers) + out block (2 buffers) + f32 intermediates
    #   (cast copy of x, rh, y, pre-store result) held live in the body.
    per_col = (2 * C * x_itemsize
               + 2 * Cout * 4
               + (C + Cmid + 3 * Cout) * 4)
    # Weights are grid-invariant but still occupy 2 pipeline buffers each.
    w_bytes = 2 * w_elems * w_itemsize
    avail = max(data_budget_bytes - w_bytes, per_col * 128)
    tile = max(128, (avail // per_col) // 128 * 128)
    tile = min(tile, Lp, 64 * 1024)
    # v7x megacore: with N == 1 make sure there are >= 2 grid steps on the
    # "parallel" L axis so the second TensorCore is not idle.
    if N == 1 and Lp >= 256:
        tile = min(tile, _round_up(Lp // 2, 128))
    return tile


def resblock1d(x, w_res, w1, w2, *, matmul_dtype=None,
               data_budget_bytes=24 * 1024 * 1024):
    """Resblock1D forward.

    x: (N, C, L).  PyTorch Conv1d weights (kernel_size=1, bias=False):
      w_res: (Cout, C, 1) or None, w1: (Cmid, C, 1), w2: (Cout, Cmid, 1).
    Returns (N, Cout, L) in x.dtype.
    """
    N, C, L = x.shape
    Cout, Cmid = w2.shape[0], w1.shape[0]
    out_dtype = x.dtype

    # bf16 matmul operands once the channel counts make this MXU-bound.
    # Accumulation stays f32 (preferred_element_type), Mish/residual stay f32.
    if matmul_dtype is None:
        matmul_dtype = jnp.bfloat16 if min(C, Cmid) >= 128 else x.dtype

    # Squeeze the trailing k=1 conv dim; already (Cout, Cin) for W @ X, so no
    # transpose.  (Weight squeeze/concat/cast are static per layer — hoist to
    # module init when calling repeatedly.)
    w1_m = w1[:, :, 0].astype(matmul_dtype)
    w2_m = w2[:, :, 0].astype(matmul_dtype)

    # Pad L to a multiple of 128 so every store is a full-width, lane-dense vst.
    Lp = _round_up(L, 128)
    if Lp != L:
        x = jnp.pad(x, ((0, 0), (0, 0), (0, Lp - L)))

    if w_res is not None:
        # Residual goes through its own conv, so x can be cast at the boundary
        # (halves x DMA bytes in the bf16 regime).
        x_in = x.astype(matmul_dtype)
        wres_m = w_res[:, :, 0].astype(matmul_dtype)
        wcat = jnp.concatenate([wres_m, w1_m], axis=0)        # (Cout+Cmid, C)
        kernel = functools.partial(_resblock_kernel_proj, c_out=Cout)
        weights = (wcat, w2_m)
        w_shapes = ((Cout + Cmid, C), (Cout, Cmid))
        w_elems = wcat.size + w2_m.size
    else:
        # Identity residual: keep x in its original dtype so the residual add
        # is full precision; the kernel casts x only for the first dot.
        x_in = x
        kernel = _resblock_kernel_ident
        weights = (w1_m, w2_m)
        w_shapes = ((Cmid, C), (Cout, Cmid))
        w_elems = w1_m.size + w2_m.size

    TILE_L = _tile_l_from_budget(
        Lp, N, C, Cmid, Cout, w_elems,
        x_itemsize=jnp.dtype(x_in.dtype).itemsize,
        w_itemsize=jnp.dtype(matmul_dtype).itemsize,
        data_budget_bytes=data_budget_bytes)

    grid = (N, pl.cdiv(Lp, TILE_L))
    x_spec = pl.BlockSpec((1, C, TILE_L), lambda n, l: (n, 0, l))
    o_spec = pl.BlockSpec((1, Cout, TILE_L), lambda n, l: (n, 0, l))
    w_specs = [pl.BlockSpec(s, lambda n, l: (0, 0)) for s in w_shapes]

    out = pl.pallas_call(
        kernel,
        out_shape=jax.ShapeDtypeStruct((N, Cout, Lp), out_dtype),
        grid=grid,
        in_specs=[x_spec] + w_specs,
        out_specs=o_spec,
        compiler_params=pltpu.CompilerParams(
            dimension_semantics=("parallel", "parallel"),
            vmem_limit_bytes=32 * 1024 * 1024),
    )(x_in, *weights)

    return out[:, :, :L] if Lp != L else out


# ---------------------------------------------------------------------------
# Pure-JAX reference of the PyTorch forward (for correctness checking only).
# ---------------------------------------------------------------------------
def _mish_ref(x):
    sp = jnp.where(x > 20.0, x, jnp.log1p(jnp.exp(jnp.minimum(x, 20.0))))
    return x * jnp.tanh(sp)


def _reference(x, w_res, w1, w2):
    def conv1x1(x_ncl, w):
        return jnp.einsum('ncl,oc->nol', x_ncl, w[:, :, 0],
                          precision=jax.lax.Precision.HIGHEST)
    residual = x if w_res is None else _mish_ref(conv1x1(x, w_res))
    h = _mish_ref(conv1x1(x, w1))
    y = conv1x1(h, w2)
    return _mish_ref(residual + y)


if __name__ == "__main__":
    key = jax.random.PRNGKey(0)
    kx, kr, k1, k2, kx2, k12, k22 = jax.random.split(key, 7)

    # --- projection-residual path (channels != out_channels) ---------------
    N, C, L, Cout = 2, 4, 16, 8
    Cmid = Cout // 2
    x = jax.random.normal(kx, (N, C, L), dtype=jnp.float32)
    w_res = 0.1 * jax.random.normal(kr, (Cout, C, 1), dtype=jnp.float32)
    w1 = 0.1 * jax.random.normal(k1, (Cmid, C, 1), dtype=jnp.float32)
    w2 = 0.1 * jax.random.normal(k2, (Cout, Cmid, 1), dtype=jnp.float32)

    out = jax.block_until_ready(resblock1d(x, w_res, w1, w2))
    ref = _reference(x, w_res, w1, w2)
    assert out.shape == (N, Cout, L), out.shape
    assert jnp.allclose(out, ref, atol=1e-3, rtol=1e-3), \
        float(jnp.max(jnp.abs(out - ref)))

    # --- identity-residual path (channels == out_channels) -----------------
    C2 = Cout2 = 8
    Cmid2 = Cout2 // 2
    x2 = jax.random.normal(kx2, (N, C2, L), dtype=jnp.float32)
    w1b = 0.1 * jax.random.normal(k12, (Cmid2, C2, 1), dtype=jnp.float32)
    w2b = 0.1 * jax.random.normal(k22, (Cout2, Cmid2, 1), dtype=jnp.float32)

    out2 = jax.block_until_ready(resblock1d(x2, None, w1b, w2b))
    ref2 = _reference(x2, None, w1b, w2b)
    assert out2.shape == (N, Cout2, L), out2.shape
    assert jnp.allclose(out2, ref2, atol=1e-3, rtol=1e-3), \
        float(jnp.max(jnp.abs(out2 - ref2)))

    print("KERNEL_OK")
</pallas_src>

<mosaic_0001>
module attributes {stable_mosaic.version = 11 : i64} {
  func.func @_resblock_kernel_proj(%arg0: i32, %arg1: i32, %arg2: memref<1x4x128xf32, #tpu.memory_space<vmem>>, %arg3: memref<12x4xf32, #tpu.memory_space<vmem>>, %arg4: memref<8x4xf32, #tpu.memory_space<vmem>>, %arg5: memref<1x8x128xf32, #tpu.memory_space<vmem>>) attributes {dimension_semantics = [#tpu.dimension_semantics<parallel>, #tpu.dimension_semantics<parallel>], iteration_bounds = array<i64: 2, 1>, scalar_prefetch = 0 : i64, scratch_operands = 0 : i64, tpu.core_type = #tpu.core_type<tc>, window_params = [{transform_indices = @transform_0, window_bounds = array<i64: 1, 4, 128>}, {pipeline_mode = #tpu.pipeline_mode<synchronous>, transform_indices = @transform_1, window_bounds = array<i64: 12, 4>}, {pipeline_mode = #tpu.pipeline_mode<synchronous>, transform_indices = @transform_2, window_bounds = array<i64: 8, 4>}, {transform_indices = @transform_3, window_bounds = array<i64: 1, 8, 128>}]} {
    %c0 = arith.constant 0 : index
    %c0_0 = arith.constant 0 : index
    %c0_1 = arith.constant 0 : index
    %0 = vector.load %arg2[%c0, %c0_0, %c0_1] : memref<1x4x128xf32, #tpu.memory_space<vmem>>, vector<1x4x128xf32>
    %1 = vector.shape_cast %0 : vector<1x4x128xf32> to vector<4x128xf32>
    %c0_2 = arith.constant 0 : index
    %c0_3 = arith.constant 0 : index
    %2 = vector.load %arg3[%c0_2, %c0_3] : memref<12x4xf32, #tpu.memory_space<vmem>>, vector<12x4xf32>
    %cst = arith.constant dense<0.000000e+00> : vector<12x128xf32>
    %3 = tpu.matmul %2, %1, %cst {dimension_numbers = #tpu.dot_dimension_numbers<[1], [0], [0], [1], [0, 0, 1, 1], [], []>} : vector<12x4xf32>, vector<4x128xf32>, vector<12x128xf32> -> vector<12x128xf32>
    %cst_4 = arith.constant 2.000000e+01 : f32
    %4 = vector.broadcast %cst_4 : f32 to vector<12x128xf32>
    %5 = arith.minimumf %3, %4 : vector<12x128xf32>
    %6 = math.exp %5 : vector<12x128xf32>
    %cst_5 = arith.constant 1.000000e+00 : f32
    %7 = vector.broadcast %cst_5 : f32 to vector<12x128xf32>
    %8 = arith.addf %7, %6 : vector<12x128xf32>
    %9 = math.log %8 : vector<12x128xf32>
    %cst_6 = arith.constant 2.000000e+01 : f32
    %10 = vector.broadcast %cst_6 : f32 to vector<12x128xf32>
    %11 = arith.cmpf ogt, %3, %10 : vector<12x128xf32>
    %12 = arith.select %11, %3, %9 : vector<12x128xi1>, vector<12x128xf32>
    %13 = math.tanh %12 : vector<12x128xf32>
    %14 = arith.mulf %3, %13 : vector<12x128xf32>
    %15 = vector.extract_strided_slice %14 {offsets = [0, 0], sizes = [8, 128], strides = [1, 1]} : vector<12x128xf32> to vector<8x128xf32>
    %16 = vector.extract_strided_slice %14 {offsets = [8, 0], sizes = [4, 128], strides = [1, 1]} : vector<12x128xf32> to vector<4x128xf32>
    %c0_7 = arith.constant 0 : index
    %c0_8 = arith.constant 0 : index
    %17 = vector.load %arg4[%c0_7, %c0_8] : memref<8x4xf32, #tpu.memory_space<vmem>>, vector<8x4xf32>
    %cst_9 = arith.constant dense<0.000000e+00> : vector<8x128xf32>
    %18 = tpu.matmul %17, %16, %cst_9 {dimension_numbers = #tpu.dot_dimension_numbers<[1], [0], [0], [1], [0, 0, 1, 1], [], []>} : vector<8x4xf32>, vector<4x128xf32>, vector<8x128xf32> -> vector<8x128xf32>
    %19 = arith.addf %15, %18 : vector<8x128xf32>
    %cst_10 = arith.constant 2.000000e+01 : f32
    %20 = vector.broadcast %cst_10 : f32 to vector<8x128xf32>
    %21 = arith.minimumf %19, %20 : vector<8x128xf32>
    %22 = math.exp %21 : vector<8x128xf32>
    %cst_11 = arith.constant 1.000000e+00 : f32
    %23 = vector.broadcast %cst_11 : f32 to vector<8x128xf32>
    %24 = arith.addf %23, %22 : vector<8x128xf32>
    %25 = math.log %24 : vector<8x128xf32>
    %cst_12 = arith.constant 2.000000e+01 : f32
    %26 = vector.broadcast %cst_12 : f32 to vector<8x128xf32>
    %27 = arith.cmpf ogt, %19, %26 : vector<8x128xf32>
    %28 = arith.select %27, %19, %25 : vector<8x128xi1>, vector<8x128xf32>
    %29 = math.tanh %28 : vector<8x128xf32>
    %30 = arith.mulf %19, %29 : vector<8x128xf32>
    %c0_13 = arith.constant 0 : index
    %c0_14 = arith.constant 0 : index
    %c0_15 = arith.constant 0 : index
    %31 = vector.load %arg5[%c0_13, %c0_14, %c0_15] : memref<1x8x128xf32, #tpu.memory_space<vmem>>, vector<1x8x128xf32>
    %32 = vector.shape_cast %31 : vector<1x8x128xf32> to vector<8x128xf32>
    %33 = vector.shape_cast %30 : vector<8x128xf32> to vector<1x8x128xf32>
    tpu.vector_store %arg5[%c0_13, %c0_14, %c0_15], %33 {strides = array<i32>} : memref<1x8x128xf32, #tpu.memory_space<vmem>>, vector<1x8x128xf32>,
    return
  }
  func.func @transform_0(%arg0: i32, %arg1: i32) -> (i32, i32, i32) {
    %c0_i32 = arith.constant 0 : i32
    %c0_i32_0 = arith.constant 0 : i32
    return %arg0, %c0_i32, %arg1 : i32, i32, i32
  }
  func.func @transform_1(%arg0: i32, %arg1: i32) -> (i32, i32) {
    %c0_i32 = arith.constant 0 : i32
    %c0_i32_0 = arith.constant 0 : i32
    %c0_i32_1 = arith.constant 0 : i32
    return %c0_i32, %c0_i32_0 : i32, i32
  }
  func.func @transform_2(%arg0: i32, %arg1: i32) -> (i32, i32) {
    %c0_i32 = arith.constant 0 : i32
    %c0_i32_0 = arith.constant 0 : i32
    %c0_i32_1 = arith.constant 0 : i32
    return %c0_i32, %c0_i32_0 : i32, i32
  }
  func.func @transform_3(%arg0: i32, %arg1: i32) -> (i32, i32, i32) {
    %c0_i32 = arith.constant 0 : i32
    %c0_i32_0 = arith.constant 0 : i32
    return %arg0, %c0_i32, %arg1 : i32, i32, i32
  }
}

</mosaic_0001>

<llo_original>
// kernel: tpu_custom_call.1
$region0: #{tpu_custom_call.1}
  #allocation0 [shape = 'u32[]', space=smem, size = 0x4, offset = 0x4, fixed_abs, tag = 'smem constant byte address 0x4 - core index']
  #allocation1 [shape = 'u32[144,128]{1,0:T(1,128)}', space=vmem, size = 0x12000, scoped, tag = 'internal scratch']
  %s0 = inlined_call_operand.vmem [shape: f32[2,4,128], index: 0, kind: input, shape index: {}]
  %s1 = inlined_call_operand.vmem [shape: f32[12,4], index: 1, kind: input, shape index: {}]
  %s2 = inlined_call_operand.vmem [shape: f32[8,4], index: 2, kind: input, shape index: {}]
  %s3 = inlined_call_operand.hbm [shape: f32[2,8,128], index: 3, kind: output, shape index: {}]
  %s4 = sld [smem:[#allocation0]]
  $region45: #{tpu_custom_call.1} parent=0
    _
  %s6 = ssub.s32 1, %s4
  %s7 = scalar_select 0, %s6, %s4
  $region1: #{tpu_custom_call.1} parent=0
    #allocation2 [shape = 'u8[8192]{0}', space=vmem, size = 0x2000, scoped, tag = 'output window, operand 0']
    #allocation3 [shape = 's32[2]{0}', space=sflag, size = 0x8, scoped, tag = 'scoped memory for tpu_custom_call.1']
    %8 = vsyncpa [#allocation3], 0
    %s9 = scalar_lea.sflag [#allocation3], 1
    %10 = vsyncpa %s9, 0
    loop: start=0, step=1, limit=4
    $region2: #{tpu_custom_call.1} parent=1 // loop_pre_header
      _
    $region3: #{tpu_custom_call.1} parent=1 // loop_header
      %s12 = sphi 0, %s16
      %p13 = scmp.ge.s32.totalorder %s12, 4
      %s19 = sphi 0, %s31
      %s20 = sphi 0, %s27
      %s21 = sphi 0, %s19
      %s22 = sphi 0, %s20
      %s23 = sphi 0, %s21
      %s24 = sphi 0, %s22
      %s36 = sphi 0, %s38
      %s39 = sphi 0, %s36
      %s40 = sphi 0, %s39
      %s56 = sphi 0, %s40
      %s60 = sphi 0, %s60
      %s62 = sphi 0, %s60
      %s63 = sphi 0, %s62
      %s77 = sphi 0, %s63
      %s81 = sphi 0, %s81
      %s83 = sphi 0, %s81
      %s84 = sphi 0, %s83
      %s98 = sphi 0, %s84
      %s106 = sphi 0, %s108
      %s109 = sphi 0, %s106
      %s110 = sphi 0, %s109
      %s126 = sphi 0, %s110
    $region4: #{tpu_custom_call.1} parent=1 // loop_header_branch
      %15 = sbr.rel (%p13) target = $region8
    $region5: #{tpu_custom_call.1} parent=1 // loop_body
      %s17 = ssub.s32 %s12, 1
      %s18 = ssub.s32 %s12, 2
      %s25 = sadd.s32 1, %s20
      %p26 = scmp.ge.s32.totalorder %s25, 1
      %s27 = scalar_select %p26, 0, %s25
      %s28 = sadd.s32 1, %s19
      %s29 = scalar_select %p26, %s28, %s19
      %p30 = scmp.ge.s32.totalorder %s29, 2
      %s31 = scalar_select %p30, 0, %s29
      %s32 = ssub.s32 %s19, %s31
      %s33 = ssub.s32 %s20, %s27
      %s34 = sor.u32 %s32, %s33
      %p35 = scmp.eq.s32.totalorder %s34, 0
      %s37 = sadd.s32 %s36, 1
      %s38 = scalar_select %p35, %s36, %s37
      %p41 = pneg %p35
      %p42 = scmp.eq.s32.totalorder %s12, 1
      %p43 = por %p41, %p42
      %p44 = scmp.ne.s32.totalorder %s36, %s39
      %p45 = scmp.eq.s32.totalorder %s12, 0
      %p46 = por %p44, %p45
      %p47 = scmp.ne.s32.totalorder %s36, %s39
      %p48 = scmp.eq.s32.totalorder %s17, 1
      %p49 = por %p47, %p48
      %p50 = scmp.ne.s32.totalorder %s39, %s40
      %p51 = scmp.eq.s32.totalorder %s17, 0
      %p52 = por %p50, %p51
      %p53 = scmp.ne.s32.totalorder %s39, %s40
      %p54 = scmp.eq.s32.totalorder %s18, 1
      %p55 = por %p53, %p54
      %p57 = scmp.ne.s32.totalorder %s40, %s56
      %p58 = scmp.eq.s32.totalorder %s18, 0
      %p59 = por %p57, %p58
      %s61 = sadd.s32 %s60, 1
      %p64 = scmp.eq.s32.totalorder %s12, 1
      %p65 = scmp.ne.s32.totalorder %s60, %s62
      %p66 = scmp.eq.s32.totalorder %s12, 0
      %p67 = por %p65, %p66
      %p68 = scmp.ne.s32.totalorder %s60, %s62
      %p69 = scmp.eq.s32.totalorder %s17, 1
      %p70 = por %p68, %p69
      %p71 = scmp.ne.s32.totalorder %s62, %s63
      %p72 = scmp.eq.s32.totalorder %s17, 0
      %p73 = por %p71, %p72
      %p74 = scmp.ne.s32.totalorder %s62, %s63
      %p75 = scmp.eq.s32.totalorder %s18, 1
      %p76 = por %p74, %p75
      %p78 = scmp.ne.s32.totalorder %s63, %s77
      %p79 = scmp.eq.s32.totalorder %s18, 0
      %p80 = por %p78, %p79
      %s82 = sadd.s32 %s81, 1
      %p85 = scmp.eq.s32.totalorder %s12, 1
      %p86 = scmp.ne.s32.totalorder %s81, %s83
      %p87 = scmp.eq.s32.totalorder %s12, 0
      %p88 = por %p86, %p87
      %p89 = scmp.ne.s32.totalorder %s81, %s83
      %p90 = scmp.eq.s32.totalorder %s17, 1
      %p91 = por %p89, %p90
      %p92 = scmp.ne.s32.totalorder %s83, %s84
      %p93 = scmp.eq.s32.totalorder %s17, 0
      %p94 = por %p92, %p93
      %p95 = scmp.ne.s32.totalorder %s83, %s84
      %p96 = scmp.eq.s32.totalorder %s18, 1
      %p97 = por %p95, %p96
      %p99 = scmp.ne.s32.totalorder %s84, %s98
      %p100 = scmp.eq.s32.totalorder %s18, 0
      %p101 = por %p99, %p100
      %s102 = ssub.s32 %s19, %s31
      %s103 = ssub.s32 %s20, %s27
      %s104 = sor.u32 %s102, %s103
      %p105 = scmp.eq.s32.totalorder %s104, 0
      %s107 = sadd.s32 %s106, 1
      %s108 = scalar_select %p105, %s106, %s107
      %p111 = pneg %p105
      %p112 = scmp.eq.s32.totalorder %s12, 1
      %p113 = por %p111, %p112
      %p114 = scmp.ne.s32.totalorder %s106, %s109
      %p115 = scmp.eq.s32.totalorder %s12, 0
      %p116 = por %p114, %p115
      %p117 = scmp.ne.s32.totalorder %s106, %s109
      %p118 = scmp.eq.s32.totalorder %s17, 1
      %p119 = por %p117, %p118
      %p120 = scmp.ne.s32.totalorder %s109, %s110
      %p121 = scmp.eq.s32.totalorder %s17, 0
      %p122 = por %p120, %p121
      %p123 = scmp.ne.s32.totalorder %s109, %s110
      %p124 = scmp.eq.s32.totalorder %s18, 1
      %p125 = por %p123, %p124
      %p127 = scmp.ne.s32.totalorder %s110, %s126
      %p128 = scmp.eq.s32.totalorder %s18, 0
      %p129 = por %p127, %p128
      %p130 = scmp.le.s32.totalorder 1, %s12
      %p131 = scmp.lt.s32.totalorder %s12, 3
      %p132 = pnand %p130, %p131
      %p133 = pneg %p132
      // Predicated region
      $region9: #{tpu_custom_call.1} parent=5 // pred_check
        _
      $region10: #{tpu_custom_call.1} parent=5 // pred_check_branch
        %135 = sbr.rel (%p132) target = $region12
      $region11: #{tpu_custom_call.1} parent=5 // pred_region
        %s136 = ssub.s32 %s12, 1
        // Predicated region
        $region13: #{tpu_custom_call.1} parent=11 // pred_check
          %p137 = pneg %p73
        $region14: #{tpu_custom_call.1} parent=11 // pred_check_branch
          %139 = sbr.rel (%p137) target = $region16
        $region15: #{tpu_custom_call.1} parent=11 // pred_region
          _
        $region16: #{tpu_custom_call.1} parent=11 // pred_fallthru
          _
        // Predicated region
        $region17: #{tpu_custom_call.1} parent=11 // pred_check
          %p140 = pneg %p94
        $region18: #{tpu_custom_call.1} parent=11 // pred_check_branch
          %142 = sbr.rel (%p140) target = $region20
        $region19: #{tpu_custom_call.1} parent=11 // pred_region
          _
        $region20: #{tpu_custom_call.1} parent=11 // pred_fallthru
          _
      $region12: #{tpu_custom_call.1} parent=5 // pred_fallthru
        _
      %p143 = scmp.lt.s32.totalorder %s12, 2
      // Predicated region
      $region21: #{tpu_custom_call.1} parent=5 // pred_check
        %p144 = pneg %p143
      $region22: #{tpu_custom_call.1} parent=5 // pred_check_branch
        %146 = sbr.rel (%p144) target = $region24
      $region23: #{tpu_custom_call.1} parent=5 // pred_region
        // Predicated region
        $region25: #{tpu_custom_call.1} parent=23 // pred_check
          %p147 = pneg %p46
        $region26: #{tpu_custom_call.1} parent=23 // pred_check_branch
          %149 = sbr.rel (%p147) target = $region28
        $region27: #{tpu_custom_call.1} parent=23 // pred_region
          %p150 = scmp.lt.s32.totalorder %s19, 1
          %s151 = scalar_select %p150, %s19, 1
          %p152 = scmp.lt.s32.totalorder %s20, 0
          %s153 = scalar_select %p152, %s20, 0
          %s154 = sadd.s32 %s153, %s151
          %s155 = smul.addr %s154, 4
          %s156 = scalar_lea.vmem %s0, %s155
        $region28: #{tpu_custom_call.1} parent=23 // pred_fallthru
          _
      $region24: #{tpu_custom_call.1} parent=5 // pred_fallthru
        _
      %p157 = scmp.le.s32.totalorder 1, %s12
      %p158 = scmp.lt.s32.totalorder %s12, 3
      %p159 = pnand %p157, %p158
      %p160 = pneg %p159
      // Predicated region
      $region29: #{tpu_custom_call.1} parent=5 // pred_check
        _
      $region30: #{tpu_custom_call.1} parent=5 // pred_check_branch
        %162 = sbr.rel (%p159) target = $region32
      $region31: #{tpu_custom_call.1} parent=5 // pred_region
        %s163 = ssub.s32 %s12, 1
        %p164 = scmp.lt.s32.totalorder %s21, 1
        %s165 = scalar_select %p164, %s21, 1
        %p166 = scmp.lt.s32.totalorder %s22, 0
        %s167 = scalar_select %p166, %s22, 0
        %s168 = sadd.s32 %s167, %s165
        %s169 = smul.addr %s168, 4
        %s170 = scalar_lea.vmem %s0, %s169
        %p171 = pneg %p52
        %p172 = pneg %p49
        %p173 = pneg %p73
        %p174 = pneg %p70
        %p175 = pneg %p94
        %p176 = pneg %p91
        %p177 = pneg %p122
        %p178 = pneg %p119
        %s179 = sand.u32 %s109, 1
        %s180 = scalar_lea.sflag [#allocation3], %s179
        %s181 = sand.u32 %s109, 1
        %s182 = smul.addr %s181, 8
        %s183 = scalar_lea.vmem [#allocation2], %s182
        %p184 = scmp.lt.s32.totalorder %s21, 1
        %s185 = scalar_select %p184, %s21, 1
        %p186 = scmp.lt.s32.totalorder %s22, 0
        %s187 = scalar_select %p186, %s22, 0
        %s188 = sadd.s32 %s187, %s185
        %s189 = smul.addr %s188, 4
        %s190 = scalar_lea.vmem %s0, %s189
        %v191 = vld [vmem:[%s190] sm:$0xf]
        %v192 = vld [vmem:[%s1] sm:$0xff]
        %v193 = vld [vmem:[%s1 + $0x8] sm:$0xf]
        %vm194 = vcmask 31744
        %v196 = vsel %vm194, %v192, 0
        %v199 = vsel %vm194, %v193, 0
        %vm201 = vcmask 1043456
        %v203 = vsel %vm201, %v191, 0
        %205 = vmatprep.subr.mxu0 0.0
        %206 = vmatpush1.msra.mxu0 %v203
        %207 = vmatprep.subr.mxu0 0.0
        %208 = vmatpush1.msra.mxu0 0.0
        %209 = vmatprep.subr.mxu0 0.0
        %210 = vmatpush1.msra.mxu0 0.0
        %211 = vmatprep.subr.mxu0 0.0
        %212 = vmatpush1.msra.mxu0 0.0
        %213 = vmatprep.subr.mxu0 0.0
        %214 = vmatpush1.msra.mxu0 0.0
        %215 = vmatprep.subr.mxu0 0.0
        %216 = vmatpush1.msra.mxu0 0.0
        %217 = vmatprep.subr.mxu0 0.0
        %218 = vmatpush1.msra.mxu0 0.0
        %219 = vmatprep.subr.mxu0 0.0
        %220 = vmatpush1.msra.mxu0 0.0
        %221 = vmatprep.subr.mxu0 0.0
        %222 = vmatpush1.msra.mxu0 0.0
        %223 = vmatprep.subr.mxu0 0.0
        %224 = vmatpush1.msra.mxu0 0.0
        %225 = vmatprep.subr.mxu0 0.0
        %226 = vmatpush1.msra.mxu0 0.0
        %227 = vmatprep.subr.mxu0 0.0
        %228 = vmatpush1.msra.mxu0 0.0
        %229 = vmatprep.subr.mxu0 0.0
        %230 = vmatpush1.msra.mxu0 0.0
        %231 = vmatprep.subr.mxu0 0.0
        %232 = vmatpush1.msra.mxu0 0.0
        %233 = vmatprep.subr.mxu0 0.0
        %234 = vmatpush1.msra.mxu0 0.0
        %235 = vmatprep.subr.mxu0 0.0
        %236 = vmatpush1.msra.mxu0 0.0
        %237 = vmatprep.subr.mxu0 0.0
        %238 = vmatpush1.msra.mxu0 0.0
        %239 = vmatprep.subr.mxu0 0.0
        %240 = vmatpush1.msra.mxu0 0.0
        %241 = vmatprep.subr.mxu0 0.0
        %242 = vmatpush1.msra.mxu0 0.0
        %243 = vmatprep.subr.mxu0 0.0
        %244 = vmatpush1.msra.mxu0 0.0
        %245 = vmatprep.subr.mxu0 0.0
        %246 = vmatpush1.msra.mxu0 0.0
        %247 = vmatprep.subr.mxu0 0.0
        %248 = vmatpush1.msra.mxu0 0.0
        %249 = vmatprep.subr.mxu0 0.0
        %250 = vmatpush1.msra.mxu0 0.0
        %251 = vmatprep.subr.mxu0 0.0
        %252 = vmatpush1.msra.mxu0 0.0
        %253 = vmatprep.subr.mxu0 0.0
        %254 = vmatpush1.msra.mxu0 0.0
        %255 = vmatprep.subr.mxu0 0.0
        %256 = vmatpush1.msra.mxu0 0.0
        %257 = vmatprep.subr.mxu0 0.0
        %258 = vmatpush1.msra.mxu0 0.0
        %259 = vmatprep.subr.mxu0 0.0
        %260 = vmatpush1.msra.mxu0 0.0
        %261 = vmatprep.subr.mxu0 0.0
        %262 = vmatpush1.msra.mxu0 0.0
        %263 = vmatprep.subr.mxu0 0.0
        %264 = vmatpush1.msra.mxu0 0.0
        %265 = vmatprep.subr.mxu0 0.0
        %266 = vmatpush1.msra.mxu0 0.0
        %267 = vmatprep.subr.mxu0 0.0
        %268 = vmatpush1.msra.mxu0 0.0
        %269 = vmatprep.mubr.f32.mxu0 0.0
        %270 = vmatmul.mubr.f32.gmra.mrb[0].mxu0 %v196
        %v271 = vpop.f32.mrb[0].mxu0
        %v272 = vadd.f32 0.0, %v271
        %v273 = vpop.f32.mrb[0].mxu0
        %274 = vmatprep.mubr.f32.mxu0 0.0
        %275 = vmatmul.mubr.f32.gmra.mrb[0].mxu0 %v199
        %v276 = vpop.f32.mrb[0].mxu0
        %v277 = vadd.f32 0.0, %v276
        %v278 = vpop.f32.mrb[0].mxu0
        %279 = vdwg.mxu0
        %v280 = vmin.f32 %v272, 20.0
        %v281 = vmin.f32 %v277, 20.0
        %v282 = vmul.f32 %v280, 1.442695
        %v283 = vpow.pop %v282
        %v284 = vmul.f32 %v281, 1.442695
        %v285 = vpow.pop %v284
        %v286 = vadd.f32 %v283, 1.0
        %v287 = vadd.f32 %v285, 1.0
        %v288 = vlog2.pop %v286
        %v289 = vmul.f32 %v288, 0.6931472
        %v290 = vlog2.pop %v287
        %v291 = vmul.f32 %v290, 0.6931472
        %vm292 = vcmp.gt.f32.partialorder %v272, 20.0
        %vm293 = vcmp.gt.f32.partialorder %v277, 20.0
        %v294 = vsel %vm292, %v272, %v289
        %v295 = vsel %vm293, %v277, %v291
        %v296 = vtanh.pop %v294
        %v297 = vtanh.pop %v295
        %v298 = vmul.f32 %v272, %v296
        %v299 = vmul.f32 %v277, %v297
        %v300 = vld [vmem:[%s2] sm:$0xff]
        %v302 = vsel %vm194, %v300, 0
        %v305 = vsel %vm201, %v299, 0
        %307 = vmatprep.subr.mxu0 0.0
        %308 = vmatpush1.msra.mxu0 %v305
        %309 = vmatprep.subr.mxu0 0.0
        %310 = vmatpush1.msra.mxu0 0.0
        %311 = vmatprep.subr.mxu0 0.0
        %312 = vmatpush1.msra.mxu0 0.0
        %313 = vmatprep.subr.mxu0 0.0
        %314 = vmatpush1.msra.mxu0 0.0
        %315 = vmatprep.subr.mxu0 0.0
        %316 = vmatpush1.msra.mxu0 0.0
        %317 = vmatprep.subr.mxu0 0.0
        %318 = vmatpush1.msra.mxu0 0.0
        %319 = vmatprep.subr.mxu0 0.0
        %320 = vmatpush1.msra.mxu0 0.0
        %321 = vmatprep.subr.mxu0 0.0
        %322 = vmatpush1.msra.mxu0 0.0
        %323 = vmatprep.subr.mxu0 0.0
        %324 = vmatpush1.msra.mxu0 0.0
        %325 = vmatprep.subr.mxu0 0.0
        %326 = vmatpush1.msra.mxu0 0.0
        %327 = vmatprep.subr.mxu0 0.0
        %328 = vmatpush1.msra.mxu0 0.0
        %329 = vmatprep.subr.mxu0 0.0
        %330 = vmatpush1.msra.mxu0 0.0
        %331 = vmatprep.subr.mxu0 0.0
        %332 = vmatpush1.msra.mxu0 0.0
        %333 = vmatprep.subr.mxu0 0.0
        %334 = vmatpush1.msra.mxu0 0.0
        %335 = vmatprep.subr.mxu0 0.0
        %336 = vmatpush1.msra.mxu0 0.0
        %337 = vmatprep.subr.mxu0 0.0
        %338 = vmatpush1.msra.mxu0 0.0
        %339 = vmatprep.subr.mxu0 0.0
        %340 = vmatpush1.msra.mxu0 0.0
        %341 = vmatprep.subr.mxu0 0.0
        %342 = vmatpush1.msra.mxu0 0.0
        %343 = vmatprep.subr.mxu0 0.0
        %344 = vmatpush1.msra.mxu0 0.0
        %345 = vmatprep.subr.mxu0 0.0
        %346 = vmatpush1.msra.mxu0 0.0
        %347 = vmatprep.subr.mxu0 0.0
        %348 = vmatpush1.msra.mxu0 0.0
        %349 = vmatprep.subr.mxu0 0.0
        %350 = vmatpush1.msra.mxu0 0.0
        %351 = vmatprep.subr.mxu0 0.0
        %352 = vmatpush1.msra.mxu0 0.0
        %353 = vmatprep.subr.mxu0 0.0
        %354 = vmatpush1.msra.mxu0 0.0
        %355 = vmatprep.subr.mxu0 0.0
        %356 = vmatpush1.msra.mxu0 0.0
        %357 = vmatprep.subr.mxu0 0.0
        %358 = vmatpush1.msra.mxu0 0.0
        %359 = vmatprep.subr.mxu0 0.0
        %360 = vmatpush1.msra.mxu0 0.0
        %361 = vmatprep.subr.mxu0 0.0
        %362 = vmatpush1.msra.mxu0 0.0
        %363 = vmatprep.subr.mxu0 0.0
        %364 = vmatpush1.msra.mxu0 0.0
        %365 = vmatprep.subr.mxu0 0.0
        %366 = vmatpush1.msra.mxu0 0.0
        %367 = vmatprep.subr.mxu0 0.0
        %368 = vmatpush1.msra.mxu0 0.0
        %369 = vmatprep.subr.mxu0 0.0
        %370 = vmatpush1.msra.mxu0 0.0
        %371 = vmatprep.mubr.f32.mxu0 0.0
        %372 = vmatmul.mubr.f32.gmra.mrb[0].mxu0 %v302
        %v373 = vpop.f32.mrb[0].mxu0
        %v374 = vadd.f32 0.0, %v373
        %v375 = vpop.f32.mrb[0].mxu0
        %376 = vdwg.mxu0
        %v377 = vadd.f32 %v298, %v374
        %v378 = vmin.f32 %v377, 20.0
        %v379 = vmul.f32 %v378, 1.442695
        %v380 = vpow.pop %v379
        %v381 = vadd.f32 %v380, 1.0
        %v382 = vlog2.pop %v381
        %v383 = vmul.f32 %v382, 0.6931472
        %vm384 = vcmp.gt.f32.partialorder %v377, 20.0
        %v385 = vsel %vm384, %v377, %v383
        %v386 = vtanh.pop %v385
        %v387 = vmul.f32 %v377, %v386
        %388 = vst [vmem:[%s183] sm:$0xff] %v387
        %s389 = sand.u32 %s109, 1
        %s390 = scalar_lea.sflag [#allocation3], %s389
        %s391 = sand.u32 %s109, 1
        %s392 = smul.addr %s391, 8
        %s393 = scalar_lea.vmem [#allocation2], %s392
        // Predicated region
        $region33: #{tpu_custom_call.1} parent=31 // pred_check
          %p394 = pneg %p119
        $region34: #{tpu_custom_call.1} parent=31 // pred_check_branch
          %396 = sbr.rel (%p394) target = $region36
        $region35: #{tpu_custom_call.1} parent=31 // pred_region
          %s398 = ssub.s32 128, 128
          %399 = vsyncadd %s390, %s398
          %s400 = sadd.s32 %s22, %s21
          %s401 = smul.addr %s400, 128
          %s402 = scalar_lea.hbm %s3, %s401
          %s404 = sshll.u32 %s393, 4
          %s405 = int_to_ptr.vmem [resolvable:$true] %s404
          %407 = dma.vmem_to_hbm [thread:$0]  %s405, 128, %s402, %s390
        $region36: #{tpu_custom_call.1} parent=31 // pred_fallthru
          _
      $region32: #{tpu_custom_call.1} parent=5 // pred_fallthru
        _
      %p408 = scmp.le.s32.totalorder 2, %s12
      // Predicated region
      $region37: #{tpu_custom_call.1} parent=5 // pred_check
        %p409 = pneg %p408
      $region38: #{tpu_custom_call.1} parent=5 // pred_check_branch
        %411 = sbr.rel (%p409) target = $region40
      $region39: #{tpu_custom_call.1} parent=5 // pred_region
        %s412 = ssub.s32 %s12, 2
        // Predicated region
        $region41: #{tpu_custom_call.1} parent=39 // pred_check
          %p413 = pneg %p125
        $region42: #{tpu_custom_call.1} parent=39 // pred_check_branch
          %415 = sbr.rel (%p413) target = $region44
        $region43: #{tpu_custom_call.1} parent=39 // pred_region
          %s416 = sand.u32 %s110, 1
          %s417 = scalar_lea.sflag [#allocation3], %s416
          %s418 = sand.u32 %s110, 1
          %s419 = smul.addr %s418, 8
          %s420 = scalar_lea.vmem [#allocation2], %s419
          %421 = dma.done %s417, 128
        $region44: #{tpu_custom_call.1} parent=39 // pred_fallthru
          _
      $region40: #{tpu_custom_call.1} parent=5 // pred_fallthru
        _
    $region6: #{tpu_custom_call.1} parent=1 // loop_footer
      %s16 = sadd.s32 1, %s12
    $region7: #{tpu_custom_call.1} parent=1 // loop_footer_branch
      %11 = sbr.rel target = $region3
    $region8: #{tpu_custom_call.1} parent=1 // loop_exit
      _
    %422 = vsyncpa [#allocation3], 1
    %s423 = scalar_lea.sflag [#allocation3], 1
    %424 = vsyncpa %s423, 1

</llo_original>
